<compile_context>
chip_gen: v6e
topology: v6e:2x2x1
jax: 0.10.0
libtpu: 0.0.40
codegen_flags: <defaults>
</compile_context>

<pallas_src>
import jax
import jax.numpy as jnp
from jax.experimental import pallas as pl
from jax.experimental.pallas import tpu as pltpu


def _round_up(x: int, m: int) -> int:
    return ((x + m - 1) // m) * m


def _detect_num_tensorcores() -> int:
    """Best-effort TensorCores-per-chip (2 on v7x megacore, 1 on v5e/v6e).

    Detection failures fall back to 1, which simply means a single balanced tile
    (always correct, just leaves the second TC idle on v7x)."""
    try:
        info = pltpu.get_tpu_info()
        for attr in ("num_cores", "num_tensorcores", "tensorcores_per_chip", "core_count"):
            v = getattr(info, attr, None)
            if isinstance(v, int) and v > 0:
                return v
    except Exception:
        pass
    try:
        d = jax.devices()[0]
        v = getattr(d, "num_cores", None)
        if isinstance(v, int) and v > 0:
            return v
        if "v7" in str(getattr(d, "device_kind", "")).lower():
            return 2
    except Exception:
        pass
    return 1


def _critic_kernel(x_ref, w1_ref, w2_ref, aux_ref, out_ref):
    """One batch tile.

    x_ref   : [S,  TB]   state tile, batch on the lane axis (compute_dtype)
    w1_ref  : [H,  S]    torch-native Linear weight layout (out_features, in_features)
    w2_ref  : [H,  H]
    aux_ref : [H,  4] f32  col0=b1, col1=b2, col2=w3 (head weights), col3=b3 (bcast)
    out_ref : [1, 1, TB] f32 lane-dense Q-values for this tile
    """
    xt = x_ref[...]                                   # [S, TB]  (bf16 or f32)
    w1 = w1_ref[...]                                  # [H, S]
    w2 = w2_ref[...]                                  # [H, H]
    b1 = aux_ref[:, 0:1]                              # [H, 1]  f32
    b2 = aux_ref[:, 1:2]                              # [H, 1]  f32
    w3 = aux_ref[:, 2:3]                              # [H, 1]  f32
    b3 = aux_ref[0:1, 3:4]                            # [1, 1]  f32

    # Layer 1: Linear(state_dim, hidden) + ReLU  -> [H, TB]  (MXU, f32 accumulate)
    h1 = jnp.dot(w1, xt, preferred_element_type=jnp.float32) + b1
    h1 = jnp.maximum(h1, 0.0)

    # Layer 2: Linear(hidden, hidden) + ReLU     -> [H, TB]
    # Cast the activation back to the MXU operand dtype (no-op in the f32 path).
    h2 = jnp.dot(w2, h1.astype(w2.dtype), preferred_element_type=jnp.float32) + b2
    h2 = jnp.maximum(h2, 0.0)

    # Layer 3: Linear(hidden, 1) as f32 VPU mul + sublane (XLU) reduce; avoids an
    # N=1 MXU pass and fills unit slack left by the matmuls.
    q = jnp.sum(h2 * w3, axis=0, keepdims=True) + b3   # [1, TB]  lane-dense f32

    out_ref[...] = q[None].astype(out_ref.dtype)       # [1, 1, TB]


def critic_forward(state, params, *, block_b=None, compute_dtype=jnp.bfloat16,
                   num_tensorcores=None):
    """state: [B, state_dim] f32 -> [B, 1] f32 (matches Critic.forward).

    params is the torch-layout tuple (w1[H,S], b1[H], w2[H,H], b2[H], w3[1,H], b3[1]).
    compute_dtype controls the MXU-operand storage (bf16 default, f32 for bit-tight).
    """
    w1, b1, w2, b2, w3, b3 = params
    B, S = state.shape
    H = w1.shape[0]
    assert w1.shape == (H, S) and w2.shape == (H, H) and w3.shape == (1, H)

    operand_bytes = jnp.dtype(compute_dtype).itemsize

    # ---- batch-tile selection -------------------------------------------------
    B128 = _round_up(B, 128)                 # lane axis must be a multiple of 128
    # Per-tile VMEM budget (double-buffered x tile + f32 h1/h2 temporaries).
    per_col_bytes = 2 * S * operand_bytes + 2 * H * 4 + 16
    max_tb = max(128, ((8 * 1024 * 1024) // per_col_bytes // 128) * 128)

    if block_b is None:
        if num_tensorcores is None:
            num_tensorcores = _detect_num_tensorcores()
        # Balanced 128-multiple tiles: 1 tile on v5e/v6e (no per-grid-step overhead),
        # `num_tensorcores` tiles on v7x so the "parallel" axis feeds both TCs.
        TB = _round_up(pl.cdiv(B128, max(1, num_tensorcores)), 128)
    else:
        TB = max(128, (block_b // 128) * 128)
    TB = min(TB, B128, max_tb)

    n_tiles = pl.cdiv(B128, TB)
    B_pad = n_tiles * TB

    # ---- wrapper-side layout plumbing (cheap XLA ops) --------------------------
    # Pad the batch and put it on the lane axis; store MXU operands in compute_dtype.
    state_t = jnp.pad(state.astype(jnp.float32), ((0, B_pad - B), (0, 0))).T
    state_t = state_t.astype(compute_dtype)                                   # [S, B_pad]
    w1_c = w1.astype(compute_dtype)                                           # [H, S]
    w2_c = w2.astype(compute_dtype)                                           # [H, H]

    # Biases + head weights packed into one small f32 aux array (elementwise path
    # stays f32 on every generation, incl. v5e which has no bf16 VALU).
    aux = jnp.stack(
        [b1, b2, w3.reshape(H), jnp.broadcast_to(b3.reshape(()), (H,))], axis=1
    ).astype(jnp.float32)                                                      # [H, 4]

    flops = 2 * B_pad * (S * H + H * H + H)
    bytes_accessed = (state_t.size + w1_c.size + w2_c.size) * operand_bytes \
        + 4 * (aux.size + B_pad)

    out = pl.pallas_call(
        _critic_kernel,
        out_shape=jax.ShapeDtypeStruct((n_tiles, 1, TB), jnp.float32),
        grid_spec=pltpu.PrefetchScalarGridSpec(
            num_scalar_prefetch=0,
            grid=(n_tiles,),
            in_specs=[
                # state tile walks along the lane (batch) axis
                pl.BlockSpec((S, TB), lambda i: (0, i)),
                # weights: constant block index -> VMEM-resident, DMAed once
                pl.BlockSpec((H, S), lambda i: (0, 0)),
                pl.BlockSpec((H, H), lambda i: (0, 0)),
                pl.BlockSpec((H, 4), lambda i: (0, 0)),
            ],
            out_specs=pl.BlockSpec((1, 1, TB), lambda i: (i, 0, 0)),
        ),
        compiler_params=pltpu.CompilerParams(
            dimension_semantics=("parallel",),
        ),
        cost_estimate=pl.CostEstimate(
            flops=flops, transcendentals=0, bytes_accessed=bytes_accessed
        ),
    )(state_t, w1_c, w2_c, aux)

    # [n_tiles, 1, TB] -> flat batch order -> [B, 1]
    return out.reshape(B_pad, 1)[:B]


def init_critic_params(key, state_dim, hidden_dim):
    """torch.nn.Linear-style init & layout: weight [out_features, in_features], bias [out]."""
    def linear(k, fan_in, fan_out):
        kw, kb = jax.random.split(k)
        bound = 1.0 / jnp.sqrt(jnp.float32(fan_in))
        w = jax.random.uniform(kw, (fan_out, fan_in), jnp.float32, -bound, bound)
        b = jax.random.uniform(kb, (fan_out,), jnp.float32, -bound, bound)
        return w, b

    k1, k2, k3 = jax.random.split(key, 3)
    w1, b1 = linear(k1, state_dim, hidden_dim)
    w2, b2 = linear(k2, hidden_dim, hidden_dim)
    w3, b3 = linear(k3, hidden_dim, 1)
    return (w1, b1, w2, b2, w3, b3)


def critic_reference(state, params):
    """Pure-JAX f32 reference (identical math to the PyTorch module)."""
    w1, b1, w2, b2, w3, b3 = params
    h1 = jnp.maximum(state @ w1.T + b1, 0.0)
    h2 = jnp.maximum(h1 @ w2.T + b2, 0.0)
    return h2 @ w3.T + b3


if __name__ == "__main__":
    state_dim = 16
    hidden_dim = 32

    key = jax.random.PRNGKey(0)
    k_params, k_state = jax.random.split(key)
    params = init_critic_params(k_params, state_dim, hidden_dim)

    # 1) Small acting-style batch, default bf16 MXU operands + auto (balanced) tiling.
    s_small = jax.random.normal(jax.random.fold_in(k_state, 0), (8, state_dim), jnp.float32)
    out_small = jax.block_until_ready(critic_forward(s_small, params))
    ref_small = critic_reference(s_small, params)
    assert out_small.shape == (8, 1), out_small.shape
    assert jnp.allclose(out_small, ref_small, atol=5e-2, rtol=5e-2), (
        f"bf16 max abs err {jnp.max(jnp.abs(out_small - ref_small))}"
    )

    # 2) Training-style batch, f32 operands, forced small tile -> multi-tile grid +
    #    batch padding path, bit-tight tolerance.
    s_train = jax.random.normal(jax.random.fold_in(k_state, 1), (200, state_dim), jnp.float32)
    out_train = jax.block_until_ready(
        critic_forward(s_train, params, block_b=128, compute_dtype=jnp.float32))
    ref_train = critic_reference(s_train, params)
    assert out_train.shape == (200, 1), out_train.shape
    assert jnp.allclose(out_train, ref_train, atol=1e-4, rtol=1e-4), (
        f"f32 max abs err {jnp.max(jnp.abs(out_train - ref_train))}"
    )

    # 3) Same training batch through the default bf16 + auto-tiling path.
    out_train_bf16 = jax.block_until_ready(critic_forward(s_train, params))
    assert out_train_bf16.shape == (200, 1), out_train_bf16.shape
    assert jnp.allclose(out_train_bf16, ref_train, atol=5e-2, rtol=5e-2), (
        f"bf16 max abs err {jnp.max(jnp.abs(out_train_bf16 - ref_train))}"
    )

    print("KERNEL_OK")
</pallas_src>

<mosaic_0001>
module attributes {stable_mosaic.version = 11 : i64} {
  func.func @_critic_kernel(%arg0: i32, %arg1: memref<16x128xbf16, #tpu.memory_space<vmem>>, %arg2: memref<32x16xbf16, #tpu.memory_space<vmem>>, %arg3: memref<32x32xbf16, #tpu.memory_space<vmem>>, %arg4: memref<32x4xf32, #tpu.memory_space<vmem>>, %arg5: memref<1x1x128xf32, #tpu.memory_space<vmem>>) attributes {dimension_semantics = [#tpu.dimension_semantics<parallel>], iteration_bounds = array<i64: 1>, scalar_prefetch = 0 : i64, scratch_operands = 0 : i64, tpu.core_type = #tpu.core_type<tc>, window_params = [{transform_indices = @transform_0, window_bounds = array<i64: 16, 128>}, {pipeline_mode = #tpu.pipeline_mode<synchronous>, transform_indices = @transform_1, window_bounds = array<i64: 32, 16>}, {pipeline_mode = #tpu.pipeline_mode<synchronous>, transform_indices = @transform_2, window_bounds = array<i64: 32, 32>}, {pipeline_mode = #tpu.pipeline_mode<synchronous>, transform_indices = @transform_3, window_bounds = array<i64: 32, 4>}, {transform_indices = @transform_4, window_bounds = array<i64: 1, 1, 128>}]} {
    %c0 = arith.constant 0 : index
    %c0_0 = arith.constant 0 : index
    %0 = vector.load %arg1[%c0, %c0_0] : memref<16x128xbf16, #tpu.memory_space<vmem>>, vector<16x128xbf16>
    %c0_1 = arith.constant 0 : index
    %c0_2 = arith.constant 0 : index
    %1 = vector.load %arg2[%c0_1, %c0_2] : memref<32x16xbf16, #tpu.memory_space<vmem>>, vector<32x16xbf16>
    %c0_3 = arith.constant 0 : index
    %c0_4 = arith.constant 0 : index
    %2 = vector.load %arg3[%c0_3, %c0_4] : memref<32x32xbf16, #tpu.memory_space<vmem>>, vector<32x32xbf16>
    %c0_5 = arith.constant 0 : index
    %c0_6 = arith.constant 0 : index
    %3 = vector.load %arg4[%c0_5, %c0_6] : memref<32x4xf32, #tpu.memory_space<vmem>>, vector<32x1xf32>
    %c0_7 = arith.constant 0 : index
    %c1 = arith.constant 1 : index
    %4 = vector.load %arg4[%c0_7, %c1] : memref<32x4xf32, #tpu.memory_space<vmem>>, vector<32x1xf32>
    %c0_8 = arith.constant 0 : index
    %c2 = arith.constant 2 : index
    %5 = vector.load %arg4[%c0_8, %c2] : memref<32x4xf32, #tpu.memory_space<vmem>>, vector<32x1xf32>
    %c0_9 = arith.constant 0 : index
    %c3 = arith.constant 3 : index
    %6 = vector.load %arg4[%c0_9, %c3] : memref<32x4xf32, #tpu.memory_space<vmem>>, vector<1x1xf32>
    %cst = arith.constant dense<0.000000e+00> : vector<32x128xf32>
    %7 = tpu.matmul %1, %0, %cst {dimension_numbers = #tpu.dot_dimension_numbers<[1], [0], [0], [1], [0, 0, 1, 1], [], []>} : vector<32x16xbf16>, vector<16x128xbf16>, vector<32x128xf32> -> vector<32x128xf32>
    %8 = vector.broadcast %3 : vector<32x1xf32> to vector<32x128xf32>
    %9 = arith.addf %7, %8 : vector<32x128xf32>
    %cst_10 = arith.constant 0.000000e+00 : f32
    %10 = vector.broadcast %cst_10 : f32 to vector<32x128xf32>
    %11 = arith.maximumf %9, %10 : vector<32x128xf32>
    %12 = arith.truncf %11 : vector<32x128xf32> to vector<32x128xbf16>
    %cst_11 = arith.constant dense<0.000000e+00> : vector<32x128xf32>
    %13 = tpu.matmul %2, %12, %cst_11 {dimension_numbers = #tpu.dot_dimension_numbers<[1], [0], [0], [1], [0, 0, 1, 1], [], []>} : vector<32x32xbf16>, vector<32x128xbf16>, vector<32x128xf32> -> vector<32x128xf32>
    %14 = vector.broadcast %4 : vector<32x1xf32> to vector<32x128xf32>
    %15 = arith.addf %13, %14 : vector<32x128xf32>
    %cst_12 = arith.constant 0.000000e+00 : f32
    %16 = vector.broadcast %cst_12 : f32 to vector<32x128xf32>
    %17 = arith.maximumf %15, %16 : vector<32x128xf32>
    %18 = vector.broadcast %5 : vector<32x1xf32> to vector<32x128xf32>
    %19 = arith.mulf %17, %18 : vector<32x128xf32>
    %cst_13 = arith.constant dense<0.000000e+00> : vector<128xf32>
    %20 = vector.multi_reduction <add>, %19, %cst_13 [0] : vector<32x128xf32> to vector<128xf32>
    %21 = vector.shape_cast %20 : vector<128xf32> to vector<1x128xf32>
    %22 = vector.broadcast %6 : vector<1x1xf32> to vector<1x128xf32>
    %23 = arith.addf %21, %22 : vector<1x128xf32>
    %24 = vector.shape_cast %23 : vector<1x128xf32> to vector<1x1x128xf32>
    %c0_14 = arith.constant 0 : index
    %c0_15 = arith.constant 0 : index
    %c0_16 = arith.constant 0 : index
    %25 = vector.load %arg5[%c0_14, %c0_15, %c0_16] : memref<1x1x128xf32, #tpu.memory_space<vmem>>, vector<1x1x128xf32>
    tpu.vector_store %arg5[%c0_14, %c0_15, %c0_16], %24 {strides = array<i32>} : memref<1x1x128xf32, #tpu.memory_space<vmem>>, vector<1x1x128xf32>,
    return
  }
  func.func @transform_0(%arg0: i32) -> (i32, i32) {
    %c0_i32 = arith.constant 0 : i32
    %c0_i32_0 = arith.constant 0 : i32
    return %c0_i32, %arg0 : i32, i32
  }
  func.func @transform_1(%arg0: i32) -> (i32, i32) {
    %c0_i32 = arith.constant 0 : i32
    %c0_i32_0 = arith.constant 0 : i32
    %c0_i32_1 = arith.constant 0 : i32
    return %c0_i32, %c0_i32_0 : i32, i32
  }
  func.func @transform_2(%arg0: i32) -> (i32, i32) {
    %c0_i32 = arith.constant 0 : i32
    %c0_i32_0 = arith.constant 0 : i32
    %c0_i32_1 = arith.constant 0 : i32
    return %c0_i32, %c0_i32_0 : i32, i32
  }
  func.func @transform_3(%arg0: i32) -> (i32, i32) {
    %c0_i32 = arith.constant 0 : i32
    %c0_i32_0 = arith.constant 0 : i32
    %c0_i32_1 = arith.constant 0 : i32
    return %c0_i32, %c0_i32_0 : i32, i32
  }
  func.func @transform_4(%arg0: i32) -> (i32, i32, i32) {
    %c0_i32 = arith.constant 0 : i32
    %c0_i32_0 = arith.constant 0 : i32
    %c0_i32_1 = arith.constant 0 : i32
    return %arg0, %c0_i32, %c0_i32_0 : i32, i32, i32
  }
}

</mosaic_0001>

<llo_original>
// kernel: tpu_custom_call.1
$region0: #{tpu_custom_call.1}
  #allocation0 [shape = 'u32[]', space=smem, size = 0x4, offset = 0x4, fixed_abs, tag = 'smem constant byte address 0x4 - core index']
  #allocation1 [shape = 'u32[144,128]{1,0:T(1,128)}', space=vmem, size = 0x12000, scoped, tag = 'internal scratch']
  %s0 = inlined_call_operand.vmem [shape: bf16[16,128], index: 0, kind: input, shape index: {}]
  %s1 = inlined_call_operand.vmem [shape: bf16[32,16], index: 1, kind: input, shape index: {}]
  %s2 = inlined_call_operand.vmem [shape: bf16[32,32], index: 2, kind: input, shape index: {}]
  %s3 = inlined_call_operand.vmem [shape: f32[32,4], index: 3, kind: input, shape index: {}]
  %s4 = inlined_call_operand.hbm [shape: f32[1,1,128], index: 4, kind: output, shape index: {}]
  %s5 = sld [smem:[#allocation0]]
  $region26: #{tpu_custom_call.1} parent=0
    _
  %s7 = ssub.s32 1, %s5
  %s8 = scalar_select 0, %s7, %s5
  $region1: #{tpu_custom_call.1} parent=0
    #allocation2 [shape = 'u8[512]{0}', space=vmem, size = 0x400, scoped, tag = 'output window, operand 0, single buffered']
    #allocation3 [shape = 's32[1]{0}', space=sflag, size = 0x4, scoped, tag = 'scoped memory for tpu_custom_call.1']
    %9 = vsyncpa [#allocation3], 0
    // Predicated region
    $region2: #{tpu_custom_call.1} parent=1 // pred_check
      _
    $region3: #{tpu_custom_call.1} parent=1 // pred_check_branch
      %11 = sbr.rel (0) target = $region5
    $region4: #{tpu_custom_call.1} parent=1 // pred_region
      _
    $region5: #{tpu_custom_call.1} parent=1 // pred_fallthru
      _
    // Predicated region
    $region6: #{tpu_custom_call.1} parent=1 // pred_check
      _
    $region7: #{tpu_custom_call.1} parent=1 // pred_check_branch
      %13 = sbr.rel (0) target = $region9
    $region8: #{tpu_custom_call.1} parent=1 // pred_region
      _
    $region9: #{tpu_custom_call.1} parent=1 // pred_fallthru
      _
    // Predicated region
    $region10: #{tpu_custom_call.1} parent=1 // pred_check
      _
    $region11: #{tpu_custom_call.1} parent=1 // pred_check_branch
      %15 = sbr.rel (0) target = $region13
    $region12: #{tpu_custom_call.1} parent=1 // pred_region
      _
    $region13: #{tpu_custom_call.1} parent=1 // pred_fallthru
      _
    // Predicated region
    $region14: #{tpu_custom_call.1} parent=1 // pred_check
      _
    $region15: #{tpu_custom_call.1} parent=1 // pred_check_branch
      %17 = sbr.rel (0) target = $region17
    $region16: #{tpu_custom_call.1} parent=1 // pred_region
      _
    $region17: #{tpu_custom_call.1} parent=1 // pred_fallthru
      _
    %v19 = vld [vmem:[%s0] sm:$0xf]
    %v20 = vld [vmem:[%s0 + $0x4] sm:$0xf]
    %v21 = vld [vmem:[%s1] sm:$0xf]
    %v22 = vld [vmem:[%s1 + $0x4] sm:$0xf]
    %v23 = vld [vmem:[%s1 + $0x8] sm:$0xf]
    %v24 = vld [vmem:[%s1 + $0xc] sm:$0xf]
    %v25 = vld [vmem:[%s2] sm:$0xf]
    %v26 = vld [vmem:[%s2 + $0x4] sm:$0xf]
    %v27 = vld [vmem:[%s2 + $0x8] sm:$0xf]
    %v28 = vld [vmem:[%s2 + $0xc] sm:$0xf]
    %v29 = vld [vmem:[%s3] sm:$0xff]
    %v30 = vld [vmem:[%s3 + $0x8] sm:$0xff]
    %v31 = vld [vmem:[%s3 + $0x10] sm:$0xff]
    %v32 = vld [vmem:[%s3 + $0x18] sm:$0xff]
    %v33 = vld [vmem:[%s3] sm:$0x1]
    %35 = vset.pattern.permute.xlu0 0
    %36 = vperm.xlu0 %35, %v29
    %v37 = vpop.permute.xlu0 %36
    %40 = vset.pattern.permute.xlu0 0
    %41 = vperm.xlu0 %40, %v30
    %v42 = vpop.permute.xlu0 %41
    %45 = vset.pattern.permute.xlu0 0
    %46 = vperm.xlu0 %45, %v31
    %v47 = vpop.permute.xlu0 %46
    %50 = vset.pattern.permute.xlu0 0
    %51 = vperm.xlu0 %50, %v32
    %v52 = vpop.permute.xlu0 %51
    %v58 = vunpack.c.l.b16 %v21
    %v59 = vunpack.c.l.b16 %v22
    %v60 = vunpack.c.l.b16 %v23
    %v61 = vunpack.c.l.b16 %v24
    %v62 = vpack.c.b16 %v59, %v58
    %v63 = vpack.c.b16 %v61, %v60
    %v66 = vunpack.c.l.b16 %v19
    %v67 = vunpack.c.l.b16 %v20
    %v68 = vpack.c.b16 %v67, %v66
    %vm70 = vcmask 130048
    %v72 = vsel %vm70, %v62, 0
    %v75 = vsel %vm70, %v63, 0
    %77 = vmatprep.subr.bf16.mxu0 0
    %78 = vmatpush1.bf16.msra.mxu0 0
    %79 = vmatprep.subr.bf16.mxu0 0
    %80 = vmatpush1.bf16.msra.mxu0 0
    %81 = vmatprep.subr.bf16.mxu0 0
    %82 = vmatpush1.bf16.msra.mxu0 0
    %83 = vmatprep.subr.bf16.mxu0 0
    %84 = vmatpush1.bf16.msra.mxu0 0
    %85 = vmatprep.subr.bf16.mxu0 0
    %86 = vmatpush1.bf16.msra.mxu0 0
    %87 = vmatprep.subr.bf16.mxu0 0
    %88 = vmatpush1.bf16.msra.mxu0 0
    %89 = vmatprep.subr.bf16.mxu0 0
    %90 = vmatpush1.bf16.msra.mxu0 0
    %91 = vmatprep.subr.bf16.mxu0 0
    %92 = vmatpush1.bf16.msra.mxu0 %v68
    %93 = vmatprep.subr.bf16.mxu0 0
    %94 = vmatpush2.bf16.msra.mxu0 0
    %95 = vmatprep.subr.bf16.mxu0 0
    %96 = vmatpush2.bf16.msra.mxu0 0
    %97 = vmatprep.subr.bf16.mxu0 0
    %98 = vmatpush2.bf16.msra.mxu0 0
    %99 = vmatprep.subr.bf16.mxu0 0
    %100 = vmatpush2.bf16.msra.mxu0 0
    %101 = vmatprep.subr.bf16.mxu0 0
    %102 = vmatpush2.bf16.msra.mxu0 0
    %103 = vmatprep.subr.bf16.mxu0 0
    %104 = vmatpush2.bf16.msra.mxu0 0
    %105 = vmatprep.subr.bf16.mxu0 0
    %106 = vmatpush2.bf16.msra.mxu0 0
    %107 = vmatprep.subr.bf16.mxu0 0
    %108 = vmatpush2.bf16.msra.mxu0 0
    %109 = vmatprep.mubr.bf16.mxu0 0
    %110 = vmatmul.mubr.bf16.gmra.mxu0 %v72
    %v111 = vpop.f32.mrf.mxu0
    %v112 = vadd.f32 %v37, %v111
    %v113 = vpop.f32.mrf.mxu0
    %v114 = vpop.f32.mrf.mxu0
    %v115 = vadd.f32 %v42, %v114
    %v116 = vpop.f32.mrf.mxu0
    %117 = vmatprep.mubr.bf16.mxu0 0
    %118 = vmatmul.mubr.bf16.gmra.mxu0 %v75
    %v119 = vpop.f32.mrf.mxu0
    %v120 = vadd.f32 %v47, %v119
    %v121 = vpop.f32.mrf.mxu0
    %v122 = vpop.f32.mrf.mxu0
    %v123 = vadd.f32 %v52, %v122
    %v124 = vpop.f32.mrf.mxu0
    %125 = vdwg.mxu0
    %v126 = vmax.f32 %v112, 0.0
    %v127 = vmax.f32 %v115, 0.0
    %v128 = vmax.f32 %v120, 0.0
    %v129 = vmax.f32 %v123, 0.0
    %v130 = vpack.c.bf16 %v127, %v126
    %v131 = vpack.c.bf16 %v129, %v128
    %132 = vset.pattern.permute.xlu0 1
    %133 = vperm.xlu0 %132, %v29
    %v134 = vpop.permute.xlu0 %133
    %136 = vset.pattern.permute.xlu0 1
    %137 = vperm.xlu0 %136, %v30
    %v138 = vpop.permute.xlu0 %137
    %140 = vset.pattern.permute.xlu0 1
    %141 = vperm.xlu0 %140, %v31
    %v142 = vpop.permute.xlu0 %141
    %144 = vset.pattern.permute.xlu0 1
    %145 = vperm.xlu0 %144, %v32
    %v146 = vpop.permute.xlu0 %145
    %v152 = vunpack.c.l.b16 %v25
    %v153 = vunpack.c.l.b16 %v26
    %v154 = vunpack.c.l.b16 %v27
    %v155 = vunpack.c.l.b16 %v28
    %v156 = vpack.c.b16 %v153, %v152
    %v157 = vpack.c.b16 %v155, %v154
    %vm158 = vcmask 261120
    %v160 = vsel %vm158, %v156, 0
    %v163 = vsel %vm158, %v157, 0
    %165 = vmatprep.subr.bf16.mxu0 0
    %166 = vmatpush1.bf16.msra.mxu0 0
    %167 = vmatprep.subr.bf16.mxu0 0
    %168 = vmatpush1.bf16.msra.mxu0 0
    %169 = vmatprep.subr.bf16.mxu0 0
    %170 = vmatpush1.bf16.msra.mxu0 0
    %171 = vmatprep.subr.bf16.mxu0 0
    %172 = vmatpush1.bf16.msra.mxu0 0
    %173 = vmatprep.subr.bf16.mxu0 0
    %174 = vmatpush1.bf16.msra.mxu0 0
    %175 = vmatprep.subr.bf16.mxu0 0
    %176 = vmatpush1.bf16.msra.mxu0 0
    %177 = vmatprep.subr.bf16.mxu0 0
    %178 = vmatpush1.bf16.msra.mxu0 %v131
    %179 = vmatprep.subr.bf16.mxu0 0
    %180 = vmatpush1.bf16.msra.mxu0 %v130
    %181 = vmatprep.subr.bf16.mxu0 0
    %182 = vmatpush2.bf16.msra.mxu0 0
    %183 = vmatprep.subr.bf16.mxu0 0
    %184 = vmatpush2.bf16.msra.mxu0 0
    %185 = vmatprep.subr.bf16.mxu0 0
    %186 = vmatpush2.bf16.msra.mxu0 0
    %187 = vmatprep.subr.bf16.mxu0 0
    %188 = vmatpush2.bf16.msra.mxu0 0
    %189 = vmatprep.subr.bf16.mxu0 0
    %190 = vmatpush2.bf16.msra.mxu0 0
    %191 = vmatprep.subr.bf16.mxu0 0
    %192 = vmatpush2.bf16.msra.mxu0 0
    %193 = vmatprep.subr.bf16.mxu0 0
    %194 = vmatpush2.bf16.msra.mxu0 0
    %195 = vmatprep.subr.bf16.mxu0 0
    %196 = vmatpush2.bf16.msra.mxu0 0
    %197 = vmatprep.mubr.bf16.mxu0 0
    %198 = vmatmul.mubr.bf16.gmra.mxu0 %v160
    %v199 = vpop.f32.mrf.mxu0
    %v200 = vadd.f32 %v134, %v199
    %v201 = vpop.f32.mrf.mxu0
    %v202 = vpop.f32.mrf.mxu0
    %v203 = vadd.f32 %v138, %v202
    %v204 = vpop.f32.mrf.mxu0
    %205 = vmatprep.mubr.bf16.mxu0 0
    %206 = vmatmul.mubr.bf16.gmra.mxu0 %v163
    %v207 = vpop.f32.mrf.mxu0
    %v208 = vadd.f32 %v142, %v207
    %v209 = vpop.f32.mrf.mxu0
    %v210 = vpop.f32.mrf.mxu0
    %v211 = vadd.f32 %v146, %v210
    %v212 = vpop.f32.mrf.mxu0
    %213 = vdwg.mxu0
    %v214 = vmax.f32 %v200, 0.0
    %v215 = vmax.f32 %v203, 0.0
    %v216 = vmax.f32 %v208, 0.0
    %v217 = vmax.f32 %v211, 0.0
    %218 = vset.pattern.permute.xlu0 2
    %219 = vperm.xlu0 %218, %v29
    %v220 = vpop.permute.xlu0 %219
    %222 = vset.pattern.permute.xlu0 2
    %223 = vperm.xlu0 %222, %v30
    %v224 = vpop.permute.xlu0 %223
    %226 = vset.pattern.permute.xlu0 2
    %227 = vperm.xlu0 %226, %v31
    %v228 = vpop.permute.xlu0 %227
    %230 = vset.pattern.permute.xlu0 2
    %231 = vperm.xlu0 %230, %v32
    %v232 = vpop.permute.xlu0 %231
    %v234 = vmul.f32 %v214, %v220
    %v235 = vmul.f32 %v215, %v224
    %v236 = vmul.f32 %v216, %v228
    %v237 = vmul.f32 %v217, %v232
    %v238 = vadd.f32 %v234, %v235
    %v239 = vadd.f32 %v238, %v236
    %v240 = vadd.f32 %v239, %v237
    %v241 = vrot.slane %v240, 4
    %v242 = vadd.f32 %v240, %v241
    %v243 = vrot.slane %v242, 2
    %v244 = vadd.f32 %v242, %v243
    %v245 = vrot.slane %v244, 1
    %v246 = vadd.f32 %v244, %v245
    %248 = vset.pattern.permute.xlu0 3
    %249 = vperm.xlu0 %248, %v33
    %v250 = vpop.permute.xlu0 %249
    %v252 = vadd.f32 %v246, %v250
    %253 = vst [vmem:[#allocation2] sm:$0x1] %v252
    // Predicated region
    $region18: #{tpu_custom_call.1} parent=1 // pred_check
      _
    $region19: #{tpu_custom_call.1} parent=1 // pred_check_branch
      %255 = sbr.rel (0) target = $region21
    $region20: #{tpu_custom_call.1} parent=1 // pred_region
      %s257 = ssub.s32 16, 16
      %258 = vsyncadd [#allocation3], %s257
      %s260 = sshll.u32 [#allocation2], 4
      %s261 = int_to_ptr.vmem [resolvable:$true] %s260
      %263 = dma.vmem_to_hbm [thread:$0]  %s261, 16, %s4, [#allocation3]
    $region21: #{tpu_custom_call.1} parent=1 // pred_fallthru
      _
    // Predicated region
    $region22: #{tpu_custom_call.1} parent=1 // pred_check
      _
    $region23: #{tpu_custom_call.1} parent=1 // pred_check_branch
      %265 = sbr.rel (0) target = $region25
    $region24: #{tpu_custom_call.1} parent=1 // pred_region
      %266 = dma.done [#allocation3], 16
    $region25: #{tpu_custom_call.1} parent=1 // pred_fallthru
      _
    %267 = vsyncpa [#allocation3], 1

</llo_original>
